<compile_context>
chip_gen: v5e
topology: v5e:2x2
jax: 0.10.0
libtpu: 0.0.40
codegen_flags: <defaults>
</compile_context>

<pallas_src>
import functools

import jax
import jax.numpy as jnp
from jax import lax
from jax.experimental import pallas as pl
from jax.experimental.pallas import tpu as pltpu

EPS = 1e-3


def _round_up(x, m):
    return ((x + m - 1) // m) * m


def fc_bn_relu_kernel(x_ref, w_ref, gamma_ref, beta_ref, o_ref, acc_ref, *, inv_b):
    k = pl.program_id(1)

    @pl.when(k == 0)
    def _init():
        acc_ref[...] = jnp.zeros_like(acc_ref)

    # Partial matmul over this C_in tile: x[B, tk] contracted with W[tn, tk]
    # on their last dims -> [B, tn] f32 accumulation on the MXU.
    acc_ref[...] += lax.dot_general(
        x_ref[...],
        w_ref[...],
        dimension_numbers=(((1,), (1,)), ((), ())),
        preferred_element_type=jnp.float32,
    )

    @pl.when(k == pl.num_programs(1) - 1)
    def _finalize():
        y = acc_ref[...]
        # Single-pass batch statistics (biased variance, training-mode BN).
        s1 = jnp.sum(y, axis=0, keepdims=True)            # [1, tn]
        s2 = jnp.sum(y * y, axis=0, keepdims=True)        # [1, tn]
        mean = s1 * inv_b
        var = jnp.maximum(s2 * inv_b - mean * mean, 0.0)
        # Fold BN affine into one scale/shift; rsqrt runs on the EUP slot.
        scale = gamma_ref[...] * lax.rsqrt(var + EPS)     # [1, tn]
        shift = beta_ref[...] - mean * scale              # [1, tn]
        o_ref[...] = jnp.maximum(y * scale + shift, 0.0).astype(o_ref.dtype)


def basic_fc_forward(x, weight, bias, gamma, beta, *, tn=256, tk=512):
    """x: [B, C_in] f32; weight: [C_out, C_in]; bias/gamma/beta: [C_out]."""
    # bias is accepted for API parity with nn.Linear but is mathematically
    # cancelled by the BatchNorm mean subtraction, so it never enters the kernel.
    del bias

    B, c_in = x.shape
    c_out = weight.shape[0]

    # Lane-dense, generation-safe tiles (tn<=256, tk<=512 fits v7x's 64 MiB
    # VMEM comfortably with double-buffered inputs; v5e/v6e have more headroom).
    tk = min(tk, _round_up(c_in, 128))
    tn = min(tn, _round_up(c_out, 128))
    c_in_p = _round_up(c_in, tk)
    c_out_p = _round_up(c_out, tn)

    if c_in_p != c_in:
        x = jnp.pad(x, ((0, 0), (0, c_in_p - c_in)))
    if c_in_p != c_in or c_out_p != c_out:
        weight = jnp.pad(weight, ((0, c_out_p - c_out), (0, c_in_p - c_in)))
    gamma2 = jnp.pad(gamma, (0, c_out_p - c_out)).reshape(1, c_out_p)
    beta2 = jnp.pad(beta, (0, c_out_p - c_out)).reshape(1, c_out_p)

    grid = (c_out_p // tn, c_in_p // tk)   # (parallel feature axis, reduction last)

    out = pl.pallas_call(
        functools.partial(fc_bn_relu_kernel, inv_b=1.0 / B),
        out_shape=jax.ShapeDtypeStruct((B, c_out_p), jnp.float32),
        grid_spec=pltpu.PrefetchScalarGridSpec(
            num_scalar_prefetch=0,
            grid=grid,
            in_specs=[
                pl.BlockSpec((B, tk), lambda j, k: (0, k)),    # x
                pl.BlockSpec((tn, tk), lambda j, k: (j, k)),   # W (un-transposed)
                pl.BlockSpec((1, tn), lambda j, k: (0, j)),    # gamma
                pl.BlockSpec((1, tn), lambda j, k: (0, j)),    # beta
            ],
            out_specs=pl.BlockSpec((B, tn), lambda j, k: (0, j)),
            scratch_shapes=[pltpu.VMEM((B, tn), jnp.float32)],
        ),
        compiler_params=pltpu.CompilerParams(
            dimension_semantics=("parallel", "arbitrary")),
    )(x, weight, gamma2, beta2)

    if c_out_p != c_out:
        out = out[:, :c_out]
    return out


if __name__ == "__main__":
    key = jax.random.PRNGKey(0)
    kx, kw, kb = jax.random.split(key, 3)

    B, C_IN, C_OUT = 8, 16, 32

    x = jax.random.normal(kx, (B, C_IN), dtype=jnp.float32)

    # Deterministic synthetic params (shapes follow nn.Linear / nn.BatchNorm1d:
    # weight [C_out, C_in], bias [C_out], gamma=1, beta=0).
    bound = 1.0 / (C_IN ** 0.5)
    weight = jax.random.uniform(kw, (C_OUT, C_IN), jnp.float32, -bound, bound)
    bias = jax.random.uniform(kb, (C_OUT,), jnp.float32, -bound, bound)
    gamma = jnp.ones((C_OUT,), jnp.float32)
    beta = jnp.zeros((C_OUT,), jnp.float32)

    out = basic_fc_forward(x, weight, bias, gamma, beta)
    out = jax.block_until_ready(out)

    # Pure-JAX reference with the original semantics (bias included here —
    # it must cancel under training-mode BatchNorm, validating the fused path).
    y_ref = x @ weight.T + bias
    m = y_ref.mean(axis=0, keepdims=True)
    v = ((y_ref - m) ** 2).mean(axis=0, keepdims=True)
    ref = jnp.maximum((y_ref - m) / jnp.sqrt(v + EPS) * gamma + beta, 0.0)

    assert out.shape == (B, C_OUT)
    assert jnp.allclose(out, ref, atol=1e-4, rtol=1e-4)

    print("KERNEL_OK")
</pallas_src>

<mosaic_0001>
module attributes {stable_mosaic.version = 11 : i64} {
  func.func @fc_bn_relu_kernel(%arg0: i32, %arg1: i32, %arg2: memref<8x128xf32, #tpu.memory_space<vmem>>, %arg3: memref<128x128xf32, #tpu.memory_space<vmem>>, %arg4: memref<1x128xf32, #tpu.memory_space<vmem>>, %arg5: memref<1x128xf32, #tpu.memory_space<vmem>>, %arg6: memref<8x128xf32, #tpu.memory_space<vmem>>, %arg7: memref<8x128xf32, #tpu.memory_space<vmem>>) attributes {dimension_semantics = [#tpu.dimension_semantics<parallel>, #tpu.dimension_semantics<arbitrary>], iteration_bounds = array<i64: 1, 1>, scalar_prefetch = 0 : i64, scratch_operands = 1 : i64, tpu.core_type = #tpu.core_type<tc>, window_params = [{transform_indices = @transform_0, window_bounds = array<i64: 8, 128>}, {transform_indices = @transform_1, window_bounds = array<i64: 128, 128>}, {transform_indices = @transform_2, window_bounds = array<i64: 1, 128>}, {transform_indices = @transform_3, window_bounds = array<i64: 1, 128>}, {transform_indices = @transform_4, window_bounds = array<i64: 8, 128>}]} {
    %c0_i32 = arith.constant 0 : i32
    %0 = arith.cmpi eq, %arg1, %c0_i32 : i32
    %1 = arith.extui %0 : i1 to i32
    %c0_i32_0 = arith.constant 0 : i32
    %2 = arith.cmpi ne, %1, %c0_i32_0 : i32
    scf.if %2 {
      %cst_10 = arith.constant 0.000000e+00 : f32
      %12 = vector.broadcast %cst_10 : f32 to vector<8x128xf32>
      %c0_11 = arith.constant 0 : index
      %c0_12 = arith.constant 0 : index
      %13 = vector.load %arg7[%c0_11, %c0_12] : memref<8x128xf32, #tpu.memory_space<vmem>>, vector<8x128xf32>
      tpu.vector_store %arg7[%c0_11, %c0_12], %12 {strides = array<i32>} : memref<8x128xf32, #tpu.memory_space<vmem>>, vector<8x128xf32>,
    } else {
    }
    %c0 = arith.constant 0 : index
    %c0_1 = arith.constant 0 : index
    %3 = vector.load %arg7[%c0, %c0_1] : memref<8x128xf32, #tpu.memory_space<vmem>>, vector<8x128xf32>
    %c0_2 = arith.constant 0 : index
    %c0_3 = arith.constant 0 : index
    %4 = vector.load %arg2[%c0_2, %c0_3] : memref<8x128xf32, #tpu.memory_space<vmem>>, vector<8x128xf32>
    %c0_4 = arith.constant 0 : index
    %c0_5 = arith.constant 0 : index
    %5 = vector.load %arg3[%c0_4, %c0_5] : memref<128x128xf32, #tpu.memory_space<vmem>>, vector<128x128xf32>
    %cst = arith.constant dense<0.000000e+00> : vector<8x128xf32>
    %6 = tpu.matmul %4, %5, %cst {dimension_numbers = #tpu.dot_dimension_numbers<[1], [1], [0], [0], [0, 0, 1, 0], [], []>} : vector<8x128xf32>, vector<128x128xf32>, vector<8x128xf32> -> vector<8x128xf32>
    %7 = arith.addf %3, %6 : vector<8x128xf32>
    %c0_6 = arith.constant 0 : index
    %c0_7 = arith.constant 0 : index
    %8 = vector.load %arg7[%c0_6, %c0_7] : memref<8x128xf32, #tpu.memory_space<vmem>>, vector<8x128xf32>
    tpu.vector_store %arg7[%c0_6, %c0_7], %7 {strides = array<i32>} : memref<8x128xf32, #tpu.memory_space<vmem>>, vector<8x128xf32>,
    %c0_i32_8 = arith.constant 0 : i32
    %9 = arith.cmpi eq, %arg1, %c0_i32_8 : i32
    %10 = arith.extui %9 : i1 to i32
    %c0_i32_9 = arith.constant 0 : i32
    %11 = arith.cmpi ne, %10, %c0_i32_9 : i32
    scf.if %11 {
      %c0_10 = arith.constant 0 : index
      %c0_11 = arith.constant 0 : index
      %12 = vector.load %arg7[%c0_10, %c0_11] : memref<8x128xf32, #tpu.memory_space<vmem>>, vector<8x128xf32>
      %cst_12 = arith.constant dense<0.000000e+00> : vector<128xf32>
      %13 = vector.multi_reduction <add>, %12, %cst_12 [0] : vector<8x128xf32> to vector<128xf32>
      %14 = vector.shape_cast %13 : vector<128xf32> to vector<1x128xf32>
      %15 = arith.mulf %12, %12 : vector<8x128xf32>
      %cst_13 = arith.constant dense<0.000000e+00> : vector<128xf32>
      %16 = vector.multi_reduction <add>, %15, %cst_13 [0] : vector<8x128xf32> to vector<128xf32>
      %17 = vector.shape_cast %16 : vector<128xf32> to vector<1x128xf32>
      %cst_14 = arith.constant 1.250000e-01 : f32
      %18 = vector.broadcast %cst_14 : f32 to vector<1x128xf32>
      %19 = arith.mulf %14, %18 : vector<1x128xf32>
      %cst_15 = arith.constant 1.250000e-01 : f32
      %20 = vector.broadcast %cst_15 : f32 to vector<1x128xf32>
      %21 = arith.mulf %17, %20 : vector<1x128xf32>
      %22 = arith.mulf %19, %19 : vector<1x128xf32>
      %23 = arith.subf %21, %22 : vector<1x128xf32>
      %cst_16 = arith.constant 0.000000e+00 : f32
      %24 = vector.broadcast %cst_16 : f32 to vector<1x128xf32>
      %25 = arith.maximumf %23, %24 : vector<1x128xf32>
      %c0_17 = arith.constant 0 : index
      %c0_18 = arith.constant 0 : index
      %26 = vector.load %arg4[%c0_17, %c0_18] : memref<1x128xf32, #tpu.memory_space<vmem>>, vector<1x128xf32>
      %cst_19 = arith.constant 1.000000e-03 : f32
      %27 = vector.broadcast %cst_19 : f32 to vector<1x128xf32>
      %28 = arith.addf %25, %27 : vector<1x128xf32>
      %29 = math.rsqrt %28 : vector<1x128xf32>
      %30 = arith.mulf %26, %29 : vector<1x128xf32>
      %c0_20 = arith.constant 0 : index
      %c0_21 = arith.constant 0 : index
      %31 = vector.load %arg5[%c0_20, %c0_21] : memref<1x128xf32, #tpu.memory_space<vmem>>, vector<1x128xf32>
      %32 = arith.mulf %19, %30 : vector<1x128xf32>
      %33 = arith.subf %31, %32 : vector<1x128xf32>
      %34 = vector.broadcast %30 : vector<1x128xf32> to vector<8x128xf32>
      %35 = arith.mulf %12, %34 : vector<8x128xf32>
      %36 = vector.broadcast %33 : vector<1x128xf32> to vector<8x128xf32>
      %37 = arith.addf %35, %36 : vector<8x128xf32>
      %cst_22 = arith.constant 0.000000e+00 : f32
      %38 = vector.broadcast %cst_22 : f32 to vector<8x128xf32>
      %39 = arith.maximumf %37, %38 : vector<8x128xf32>
      %c0_23 = arith.constant 0 : index
      %c0_24 = arith.constant 0 : index
      %40 = vector.load %arg6[%c0_23, %c0_24] : memref<8x128xf32, #tpu.memory_space<vmem>>, vector<8x128xf32>
      tpu.vector_store %arg6[%c0_23, %c0_24], %39 {strides = array<i32>} : memref<8x128xf32, #tpu.memory_space<vmem>>, vector<8x128xf32>,
    } else {
    }
    return
  }
  func.func @transform_0(%arg0: i32, %arg1: i32) -> (i32, i32) {
    %c0_i32 = arith.constant 0 : i32
    %c0_i32_0 = arith.constant 0 : i32
    return %c0_i32, %arg1 : i32, i32
  }
  func.func @transform_1(%arg0: i32, %arg1: i32) -> (i32, i32) {
    %c0_i32 = arith.constant 0 : i32
    return %arg0, %arg1 : i32, i32
  }
  func.func @transform_2(%arg0: i32, %arg1: i32) -> (i32, i32) {
    %c0_i32 = arith.constant 0 : i32
    %c0_i32_0 = arith.constant 0 : i32
    return %c0_i32, %arg0 : i32, i32
  }
  func.func @transform_3(%arg0: i32, %arg1: i32) -> (i32, i32) {
    %c0_i32 = arith.constant 0 : i32
    %c0_i32_0 = arith.constant 0 : i32
    return %c0_i32, %arg0 : i32, i32
  }
  func.func @transform_4(%arg0: i32, %arg1: i32) -> (i32, i32) {
    %c0_i32 = arith.constant 0 : i32
    %c0_i32_0 = arith.constant 0 : i32
    return %c0_i32, %arg0 : i32, i32
  }
}

</mosaic_0001>

<llo_original>
// kernel: tpu_custom_call.1
$region0: #{tpu_custom_call.1}
  #allocation0 [shape = 'u32[]', space=smem, size = 0x4, offset = 0x4, fixed_abs, tag = 'smem constant byte address 0x4 - core index']
  #allocation1 [shape = 'u32[72,128]{1,0:T(1,128)}', space=vmem, size = 0x9000, scoped, tag = 'internal scratch']
  #allocation2 [shape = 'f32[8,128]{1,0:T(8,128)}', space=vmem, size = 0x1000, scoped, tag = 'scratch operand']
  %s0 = inlined_call_operand.hbm [shape: f32[8,128], index: 0, kind: input, shape index: {}]
  %s1 = inlined_call_operand.hbm [shape: f32[128,128], index: 1, kind: input, shape index: {}]
  %s2 = inlined_call_operand.vmem [shape: f32[1,128], index: 2, kind: input, shape index: {}]
  %s3 = inlined_call_operand.vmem [shape: f32[1,128], index: 3, kind: input, shape index: {}]
  %s4 = inlined_call_operand.hbm [shape: f32[8,128], index: 4, kind: output, shape index: {}]
  %s5 = sld [smem:[#allocation0]]
  $region42: #{tpu_custom_call.1} parent=0
    _
  %s7 = ssub.s32 1, %s5
  %s8 = scalar_select 0, %s7, %s5
  $region1: #{tpu_custom_call.1} parent=0
    #allocation3 [shape = 'u8[4096]{0}', space=vmem, size = 0x1000, scoped, tag = 'input window, operand 0, single buffered']
    #allocation4 [shape = 's32[1]{0}', space=sflag, size = 0x4, scoped, tag = 'scoped memory for tpu_custom_call.1']
    #allocation5 [shape = 's32[1]{0}', space=sflag, size = 0x4, scoped, tag = 'scoped memory for tpu_custom_call.1']
    #allocation6 [shape = 'u8[65536]{0}', space=vmem, size = 0x10000, scoped, tag = 'input window, operand 1, single buffered']
    #allocation7 [shape = 's32[1]{0}', space=sflag, size = 0x4, scoped, tag = 'scoped memory for tpu_custom_call.1']
    #allocation8 [shape = 'u8[4096]{0}', space=vmem, size = 0x1000, scoped, tag = 'output window, operand 0, single buffered']
    %9 = vsyncpa [#allocation4], 0
    %10 = vsyncpa [#allocation7], 0
    %11 = vsyncpa [#allocation5], 0
    // Predicated region
    $region2: #{tpu_custom_call.1} parent=1 // pred_check
      _
    $region3: #{tpu_custom_call.1} parent=1 // pred_check_branch
      %13 = sbr.rel (0) target = $region5
    $region4: #{tpu_custom_call.1} parent=1 // pred_region
      %15 = vsyncadd [#allocation4], 0
      %s17 = sshll.u32 %s0, 4
      %s18 = int_to_ptr.hbm [resolvable:$true] %s17
      %s19 = sshll.u32 [#allocation3], 4
      %s20 = int_to_ptr.vmem [resolvable:$true] %s19
      %22 = dma.hbm_to_vmem [thread:$0]  %s18, 128, %s20, [#allocation4]
    $region5: #{tpu_custom_call.1} parent=1 // pred_fallthru
      _
    // Predicated region
    $region6: #{tpu_custom_call.1} parent=1 // pred_check
      _
    $region7: #{tpu_custom_call.1} parent=1 // pred_check_branch
      %24 = sbr.rel (0) target = $region9
    $region8: #{tpu_custom_call.1} parent=1 // pred_region
      %26 = vsyncadd [#allocation7], 0
      %s27 = sshll.u32 %s1, 4
      %s28 = int_to_ptr.hbm [resolvable:$true] %s27
      %s29 = sshll.u32 [#allocation6], 4
      %s30 = int_to_ptr.vmem [resolvable:$true] %s29
      %35 = dma.hbm_to_vmem [thread:$0]  %s28, 2048, %s30, [#allocation7], 128, 128, 8
    $region9: #{tpu_custom_call.1} parent=1 // pred_fallthru
      _
    // Predicated region
    $region10: #{tpu_custom_call.1} parent=1 // pred_check
      _
    $region11: #{tpu_custom_call.1} parent=1 // pred_check_branch
      %37 = sbr.rel (0) target = $region13
    $region12: #{tpu_custom_call.1} parent=1 // pred_region
      _
    $region13: #{tpu_custom_call.1} parent=1 // pred_fallthru
      _
    // Predicated region
    $region14: #{tpu_custom_call.1} parent=1 // pred_check
      _
    $region15: #{tpu_custom_call.1} parent=1 // pred_check_branch
      %39 = sbr.rel (0) target = $region17
    $region16: #{tpu_custom_call.1} parent=1 // pred_region
      _
    $region17: #{tpu_custom_call.1} parent=1 // pred_fallthru
      _
    // Predicated region
    $region18: #{tpu_custom_call.1} parent=1 // pred_check
      _
    $region19: #{tpu_custom_call.1} parent=1 // pred_check_branch
      %41 = sbr.rel (0) target = $region21
    $region20: #{tpu_custom_call.1} parent=1 // pred_region
      %43 = dma.done [#allocation4], 128
    $region21: #{tpu_custom_call.1} parent=1 // pred_fallthru
      _
    // Predicated region
    $region22: #{tpu_custom_call.1} parent=1 // pred_check
      _
    $region23: #{tpu_custom_call.1} parent=1 // pred_check_branch
      %45 = sbr.rel (0) target = $region25
    $region24: #{tpu_custom_call.1} parent=1 // pred_region
      %47 = dma.done [#allocation7], 2048
    $region25: #{tpu_custom_call.1} parent=1 // pred_fallthru
      _
    %p48 = scmp.eq.s32.totalorder 0, 0
    // Predicated region
    $region26: #{tpu_custom_call.1} parent=1 // pred_check
      %p49 = pneg %p48
    $region27: #{tpu_custom_call.1} parent=1 // pred_check_branch
      %51 = sbr.rel (%p49) target = $region29
    $region28: #{tpu_custom_call.1} parent=1 // pred_region
      %52 = vst [vmem:[#allocation2] sm:$0xff] 0.0
    $region29: #{tpu_custom_call.1} parent=1 // pred_fallthru
      _
    %v53 = vld [vmem:[#allocation2] sm:$0xff]
    %v54 = vld [vmem:[#allocation3] sm:$0xff]
    %v55 = vld [vmem:[#allocation6] sm:$0xff]
    %v56 = vld [vmem:[#allocation6 + $0x8] sm:$0xff]
    %v57 = vld [vmem:[#allocation6 + $0x10] sm:$0xff]
    %v58 = vld [vmem:[#allocation6 + $0x18] sm:$0xff]
    %v59 = vld [vmem:[#allocation6 + $0x20] sm:$0xff]
    %v60 = vld [vmem:[#allocation6 + $0x28] sm:$0xff]
    %v61 = vld [vmem:[#allocation6 + $0x30] sm:$0xff]
    %v62 = vld [vmem:[#allocation6 + $0x38] sm:$0xff]
    %v63 = vld [vmem:[#allocation6 + $0x40] sm:$0xff]
    %v64 = vld [vmem:[#allocation6 + $0x48] sm:$0xff]
    %v65 = vld [vmem:[#allocation6 + $0x50] sm:$0xff]
    %v66 = vld [vmem:[#allocation6 + $0x58] sm:$0xff]
    %v67 = vld [vmem:[#allocation6 + $0x60] sm:$0xff]
    %v68 = vld [vmem:[#allocation6 + $0x68] sm:$0xff]
    %v69 = vld [vmem:[#allocation6 + $0x70] sm:$0xff]
    %v70 = vld [vmem:[#allocation6 + $0x78] sm:$0xff]
    %71 = vmatpush.xpose.msra.mxu0 %v70
    %72 = vmatpush.xpose.msra.mxu0 %v69
    %73 = vmatpush.xpose.msra.mxu0 %v68
    %74 = vmatpush.xpose.msra.mxu0 %v67
    %75 = vmatpush.xpose.msra.mxu0 %v66
    %76 = vmatpush.xpose.msra.mxu0 %v65
    %77 = vmatpush.xpose.msra.mxu0 %v64
    %78 = vmatpush.xpose.msra.mxu0 %v63
    %79 = vmatpush.xpose.msra.mxu0 %v62
    %80 = vmatpush.xpose.msra.mxu0 %v61
    %81 = vmatpush.xpose.msra.mxu0 %v60
    %82 = vmatpush.xpose.msra.mxu0 %v59
    %83 = vmatpush.xpose.msra.mxu0 %v58
    %84 = vmatpush.xpose.msra.mxu0 %v57
    %85 = vmatpush.xpose.msra.mxu0 %v56
    %86 = vmatpush.xpose.msra.mxu0 %v55
    %87 = vmatmul.f32.gmra.mxu0 %v54
    %v88 = vpop.f32.mrf.mxu0
    %v89 = vadd.f32 0.0, %v88
    %90 = vdwg.mxu0
    %v91 = vadd.f32 %v53, %v89
    %92 = vst [vmem:[#allocation2] sm:$0xff] %v91
    // Predicated region
    $region30: #{tpu_custom_call.1} parent=1 // pred_check
      %p93 = pneg %p48
    $region31: #{tpu_custom_call.1} parent=1 // pred_check_branch
      %95 = sbr.rel (%p93) target = $region33
    $region32: #{tpu_custom_call.1} parent=1 // pred_region
      %v96 = vld [vmem:[#allocation2] sm:$0xff]
      %v97 = vrot.slane %v96, 4
      %v98 = vadd.f32 %v96, %v97
      %v99 = vrot.slane %v98, 2
      %v100 = vadd.f32 %v98, %v99
      %v101 = vrot.slane %v100, 1
      %v102 = vadd.f32 %v100, %v101
      %v103 = vmul.f32 %v96, %v96
      %v104 = vrot.slane %v103, 4
      %v105 = vadd.f32 %v103, %v104
      %v106 = vrot.slane %v105, 2
      %v107 = vadd.f32 %v105, %v106
      %v108 = vrot.slane %v107, 1
      %v109 = vadd.f32 %v107, %v108
      %v110 = vmul.f32 %v102, 0.125
      %v111 = vmul.f32 %v109, 0.125
      %v112 = vmul.f32 %v110, %v110
      %v113 = vsub.f32 %v111, %v112
      %v114 = vmax.f32 %v113, 0.0
      %v115 = vld [vmem:[%s2] sm:$0x1]
      %v116 = vadd.f32 %v114, 0.001
      %v117 = vrsqrt.pop %v116
      %v118 = vmul.f32 %v117, %v116
      %v119 = vmul.f32 %v118, %v117
      %v120 = vmul.f32 0.5, %v119
      %v121 = vsub.f32 1.5, %v120
      %v122 = vmul.f32 %v117, %v121
      %vm123 = vweird.f32 %v116
      %vm124 = vweird.f32 %v117
      %vm125 = vmor %vm123, %vm124
      %v126 = vsel %vm125, %v117, %v122
      %v127 = vmul.f32 %v115, %v126
      %v128 = vld [vmem:[%s3] sm:$0x1]
      %v129 = vmul.f32 %v110, %v127
      %v130 = vsub.f32 %v128, %v129
      %v132 = vperm.slane %v127, 0
      %v134 = vmul.f32 %v96, %v132
      %v136 = vperm.slane %v130, 0
      %v138 = vadd.f32 %v134, %v136
      %v139 = vmax.f32 %v138, 0.0
      %140 = vst [vmem:[#allocation8] sm:$0xff] %v139
    $region33: #{tpu_custom_call.1} parent=1 // pred_fallthru
      _
    // Predicated region
    $region34: #{tpu_custom_call.1} parent=1 // pred_check
      _
    $region35: #{tpu_custom_call.1} parent=1 // pred_check_branch
      %142 = sbr.rel (0) target = $region37
    $region36: #{tpu_custom_call.1} parent=1 // pred_region
      %144 = vsyncadd [#allocation5], 0
      %s146 = sshll.u32 [#allocation8], 4
      %s147 = int_to_ptr.vmem [resolvable:$true] %s146
      %s148 = sshll.u32 %s4, 4
      %s149 = int_to_ptr.hbm [resolvable:$true] %s148
      %151 = dma.vmem_to_hbm [thread:$0]  %s147, 128, %s149, [#allocation5]
    $region37: #{tpu_custom_call.1} parent=1 // pred_fallthru
      _
    // Predicated region
    $region38: #{tpu_custom_call.1} parent=1 // pred_check
      _
    $region39: #{tpu_custom_call.1} parent=1 // pred_check_branch
      %153 = sbr.rel (0) target = $region41
    $region40: #{tpu_custom_call.1} parent=1 // pred_region
      %155 = dma.done [#allocation5], 128
    $region41: #{tpu_custom_call.1} parent=1 // pred_fallthru
      _
    %156 = vsyncpa [#allocation4], 1
    %157 = vsyncpa [#allocation7], 1
    %158 = vsyncpa [#allocation5], 1

</llo_original>
